<compile_context>
chip_gen: v7x
topology: tpu7x:2x2x1
jax: 0.10.0
libtpu: 0.0.40
codegen_flags: <defaults>
</compile_context>

<pallas_src>
import jax
import jax.numpy as jnp
from jax.experimental import pallas as pl
from jax.experimental.pallas import tpu as pltpu


def _drop_path_kernel(x_ref, m_ref, o_ref):
    # (nb, tf) * (nb, 1): per-sample keep/scale broadcast over the lane axis.
    o_ref[...] = x_ref[...] * m_ref[...]


def _vmem_budgets():
    """Generation-aware per-block-buffer budget and pallas VMEM limit."""
    cap = 64 << 20  # conservative fallback (v7x-sized VMEM)
    try:
        info_cap = pltpu.get_tpu_info().vmem_capacity_bytes
        if isinstance(info_cap, int) and info_cap > 0:
            cap = info_cap
    except Exception:
        pass
    per_buf = min(8 << 20, cap // 10)       # ~8 MiB (v5e/v6e), ~6.4 MiB (v7x)
    vmem_limit = min(64 << 20, (cap * 3) // 4)  # 64 MiB / 48 MiB
    return per_buf, vmem_limit


def _choose_tiles(rows, f, itemsize, per_buf_budget, min_steps=2):
    """Pick (nb, tf): nb multiple of 8 (or == rows when rows < 8), tf multiple
    of 128 (or == f), each block buffer within per_buf_budget, and at least
    `min_steps` grid steps so both v7x TensorCores get work and the DMA
    pipeline has something to overlap."""
    # Sublane tile.
    if rows < 8:
        nb = rows  # block == full dim is always legal
    else:
        nb = (rows // 8) * 8
        while nb > 8 and nb * 128 * itemsize > per_buf_budget:
            nb = max(8, (nb // 2 // 8) * 8)

    # Lane tile: full F if it fits, else the largest multiple of 128 in budget.
    max_tf = max(128, (per_buf_budget // max(1, nb * itemsize)) // 128 * 128)
    tf = f if f <= max_tf else max_tf

    # Keep >= min_steps grid steps (prefer splitting F; stays lane-dense).
    while pl.cdiv(rows, nb) * pl.cdiv(f, tf) < min_steps:
        if tf >= 256:
            tf = ((tf // 2 + 127) // 128) * 128
        elif rows % 8 == 0 and nb >= 16:
            nb = max(8, (nb // 2 // 8) * 8)
        else:
            break
    return nb, tf


def drop_path(x, drop_prob=0.0, training=False, scale_by_keep=True, *, seed=0):
    """Pallas implementation of timm-style drop_path (per-sample stochastic depth)."""
    if drop_prob == 0.0 or not training:
        return x

    keep_prob = 1.0 - drop_prob
    orig_shape = x.shape
    n = orig_shape[0]

    # Per-sample keep mask, computed once, pre-scaled, cast to x.dtype on host.
    key = jax.random.PRNGKey(seed)
    keep = jax.random.bernoulli(key, p=keep_prob, shape=(n, 1)).astype(jnp.float32)
    if keep_prob > 0.0 and scale_by_keep:
        mask = keep / jnp.float32(keep_prob)
    else:
        mask = keep
    mask = mask.astype(x.dtype)

    # Flatten to (rows, F).  If N isn't sublane-aligned and a channel axis
    # exists with enough remaining features, fold C into the row axis so
    # (8,128) vreg tiles stay full; the mask repeats C times per sample.
    fold = 1
    feat_dims = orig_shape[1:]
    if n % 8 != 0 and x.ndim >= 3:
        rest = 1
        for d in orig_shape[2:]:
            rest *= d
        if rest >= 128:
            fold = orig_shape[1]
            feat_dims = orig_shape[2:]
    rows = n * fold
    f = 1
    for d in feat_dims:
        f *= d
    x2 = x.reshape(rows, f)
    if fold > 1:
        mask = jnp.repeat(mask, fold, axis=0)

    itemsize = jnp.dtype(x.dtype).itemsize
    per_buf_budget, vmem_limit = _vmem_budgets()
    nb, tf = _choose_tiles(rows, f, itemsize, per_buf_budget)
    grid = (pl.cdiv(rows, nb), pl.cdiv(f, tf))

    out2 = pl.pallas_call(
        _drop_path_kernel,
        out_shape=jax.ShapeDtypeStruct((rows, f), x.dtype),
        grid=grid,
        in_specs=[
            pl.BlockSpec((nb, tf), lambda i, j: (i, j)),
            pl.BlockSpec((nb, 1), lambda i, j: (i, 0)),
        ],
        out_specs=pl.BlockSpec((nb, tf), lambda i, j: (i, j)),
        compiler_params=pltpu.CompilerParams(
            dimension_semantics=("parallel", "parallel"),
            vmem_limit_bytes=int(vmem_limit),
        ),
        cost_estimate=pl.CostEstimate(
            flops=rows * f,
            transcendentals=0,
            bytes_accessed=2 * rows * f * itemsize + rows * itemsize,
        ),
    )(x2, mask)

    return out2.reshape(orig_shape)


class DropPath:
    """Drop paths (Stochastic Depth) per sample."""

    def __init__(self, drop_prob=None, scale_by_keep=True):
        self.drop_prob = drop_prob
        self.scale_by_keep = scale_by_keep
        self.training = True

    def __call__(self, x, seed=0):
        return drop_path(
            x,
            self.drop_prob if self.drop_prob is not None else 0.0,
            self.training,
            self.scale_by_keep,
            seed=seed,
        )


if __name__ == "__main__":
    key = jax.random.PRNGKey(0)
    # NCHW input, small shapes
    x = jax.random.normal(key, (2, 4, 16, 16), dtype=jnp.float32)

    mod = DropPath(drop_prob=0.3, scale_by_keep=True)
    mod.training = True
    y = mod(x, seed=42)
    y = jax.block_until_ready(y)

    # sanity: each sample is either all zeros or x scaled by 1/keep_prob
    keep_prob = 1.0 - 0.3
    for i in range(x.shape[0]):
        row = y[i]
        is_zero = bool(jnp.all(row == 0))
        is_scaled = bool(
            jnp.allclose(row, x[i] / keep_prob, rtol=1e-5, atol=1e-5)
        )
        assert is_zero or is_scaled, f"sample {i}: invalid drop_path output"

    # eval mode / drop_prob=0 is identity
    mod.training = False
    y_eval = jax.block_until_ready(mod(x))
    assert bool(jnp.all(y_eval == x))

    print("KERNEL_OK")
</pallas_src>

<mosaic_0001>
module attributes {stable_mosaic.version = 11 : i64} {
  func.func @_drop_path_kernel(%arg0: i32, %arg1: i32, %arg2: memref<8x128xf32, #tpu.memory_space<vmem>>, %arg3: memref<8x1xf32, #tpu.memory_space<vmem>>, %arg4: memref<8x128xf32, #tpu.memory_space<vmem>>) attributes {dimension_semantics = [#tpu.dimension_semantics<parallel>, #tpu.dimension_semantics<parallel>], iteration_bounds = array<i64: 1, 2>, scalar_prefetch = 0 : i64, scratch_operands = 0 : i64, tpu.core_type = #tpu.core_type<tc>, window_params = [{transform_indices = @transform_0, window_bounds = array<i64: 8, 128>}, {transform_indices = @transform_1, window_bounds = array<i64: 8, 1>}, {transform_indices = @transform_2, window_bounds = array<i64: 8, 128>}]} {
    %c0 = arith.constant 0 : index
    %c0_0 = arith.constant 0 : index
    %0 = vector.load %arg2[%c0, %c0_0] : memref<8x128xf32, #tpu.memory_space<vmem>>, vector<8x128xf32>
    %c0_1 = arith.constant 0 : index
    %c0_2 = arith.constant 0 : index
    %1 = vector.load %arg3[%c0_1, %c0_2] : memref<8x1xf32, #tpu.memory_space<vmem>>, vector<8x1xf32>
    %2 = vector.broadcast %1 : vector<8x1xf32> to vector<8x128xf32>
    %3 = arith.mulf %0, %2 : vector<8x128xf32>
    %c0_3 = arith.constant 0 : index
    %c0_4 = arith.constant 0 : index
    %4 = vector.load %arg4[%c0_3, %c0_4] : memref<8x128xf32, #tpu.memory_space<vmem>>, vector<8x128xf32>
    tpu.vector_store %arg4[%c0_3, %c0_4], %3 {strides = array<i32>} : memref<8x128xf32, #tpu.memory_space<vmem>>, vector<8x128xf32>,
    return
  }
  func.func @transform_0(%arg0: i32, %arg1: i32) -> (i32, i32) {
    %c0_i32 = arith.constant 0 : i32
    return %arg0, %arg1 : i32, i32
  }
  func.func @transform_1(%arg0: i32, %arg1: i32) -> (i32, i32) {
    %c0_i32 = arith.constant 0 : i32
    %c0_i32_0 = arith.constant 0 : i32
    return %arg0, %c0_i32 : i32, i32
  }
  func.func @transform_2(%arg0: i32, %arg1: i32) -> (i32, i32) {
    %c0_i32 = arith.constant 0 : i32
    return %arg0, %arg1 : i32, i32
  }
}

</mosaic_0001>

<llo_original>
// kernel: tpu_custom_call.1
$region0: #{tpu_custom_call.1}
  #allocation0 [shape = 'u32[]', space=smem, size = 0x4, offset = 0x4, fixed_abs, tag = 'smem constant byte address 0x4 - core index']
  #allocation1 [shape = 'u32[144,128]{1,0:T(1,128)}', space=vmem, size = 0x12000, scoped, tag = 'internal scratch']
  %s0 = inlined_call_operand.hbm [shape: f32[8,256], index: 0, kind: input, shape index: {}]
  %s1 = inlined_call_operand.vmem [shape: f32[8,1], index: 1, kind: input, shape index: {}]
  %s2 = inlined_call_operand.hbm [shape: f32[8,256], index: 2, kind: output, shape index: {}]
  %s3 = sld [smem:[#allocation0]]
  $region45: #{tpu_custom_call.1} parent=0
    _
  %s5 = ssub.s32 1, %s3
  %s6 = scalar_select 0, %s5, %s3
  $region1: #{tpu_custom_call.1} parent=0
    #allocation2 [shape = 'u8[8192]{0}', space=vmem, size = 0x2000, scoped, tag = 'input window, operand 0']
    #allocation3 [shape = 's32[2]{0}', space=sflag, size = 0x8, scoped, tag = 'scoped memory for tpu_custom_call.1']
    #allocation4 [shape = 's32[2]{0}', space=sflag, size = 0x8, scoped, tag = 'scoped memory for tpu_custom_call.1']
    #allocation5 [shape = 'u8[8192]{0}', space=vmem, size = 0x2000, scoped, tag = 'output window, operand 0']
    %7 = vsyncpa [#allocation3], 0
    %s8 = scalar_lea.sflag [#allocation3], 1
    %9 = vsyncpa %s8, 0
    %10 = vsyncpa [#allocation4], 0
    %s11 = scalar_lea.sflag [#allocation4], 1
    %12 = vsyncpa %s11, 0
    loop: start=0, step=1, limit=4
    $region2: #{tpu_custom_call.1} parent=1 // loop_pre_header
      _
    $region3: #{tpu_custom_call.1} parent=1 // loop_header
      %s14 = sphi 0, %s18
      %p15 = scmp.ge.s32.totalorder %s14, 4
      %s21 = sphi 0, %s33
      %s22 = sphi 0, %s29
      %s23 = sphi 0, %s21
      %s24 = sphi 0, %s22
      %s25 = sphi 0, %s23
      %s26 = sphi 0, %s24
      %s38 = sphi 0, %s40
      %s41 = sphi 0, %s38
      %s42 = sphi 0, %s41
      %s58 = sphi 0, %s42
      %s64 = sphi 0, %s66
      %s67 = sphi 0, %s64
      %s68 = sphi 0, %s67
      %s84 = sphi 0, %s68
      %s92 = sphi 0, %s94
      %s95 = sphi 0, %s92
      %s96 = sphi 0, %s95
      %s112 = sphi 0, %s96
    $region4: #{tpu_custom_call.1} parent=1 // loop_header_branch
      %17 = sbr.rel (%p15) target = $region8
    $region5: #{tpu_custom_call.1} parent=1 // loop_body
      %s19 = ssub.s32 %s14, 1
      %s20 = ssub.s32 %s14, 2
      %s27 = sadd.s32 1, %s22
      %p28 = scmp.ge.s32.totalorder %s27, 2
      %s29 = scalar_select %p28, 0, %s27
      %s30 = sadd.s32 1, %s21
      %s31 = scalar_select %p28, %s30, %s21
      %p32 = scmp.ge.s32.totalorder %s31, 1
      %s33 = scalar_select %p32, 0, %s31
      %s34 = ssub.s32 %s21, %s33
      %s35 = ssub.s32 %s22, %s29
      %s36 = sor.u32 %s34, %s35
      %p37 = scmp.eq.s32.totalorder %s36, 0
      %s39 = sadd.s32 %s38, 1
      %s40 = scalar_select %p37, %s38, %s39
      %p43 = pneg %p37
      %p44 = scmp.eq.s32.totalorder %s14, 1
      %p45 = por %p43, %p44
      %p46 = scmp.ne.s32.totalorder %s38, %s41
      %p47 = scmp.eq.s32.totalorder %s14, 0
      %p48 = por %p46, %p47
      %p49 = scmp.ne.s32.totalorder %s38, %s41
      %p50 = scmp.eq.s32.totalorder %s19, 1
      %p51 = por %p49, %p50
      %p52 = scmp.ne.s32.totalorder %s41, %s42
      %p53 = scmp.eq.s32.totalorder %s19, 0
      %p54 = por %p52, %p53
      %p55 = scmp.ne.s32.totalorder %s41, %s42
      %p56 = scmp.eq.s32.totalorder %s20, 1
      %p57 = por %p55, %p56
      %p59 = scmp.ne.s32.totalorder %s42, %s58
      %p60 = scmp.eq.s32.totalorder %s20, 0
      %p61 = por %p59, %p60
      %s62 = ssub.s32 %s21, %s33
      %p63 = scmp.eq.s32.totalorder %s62, 0
      %s65 = sadd.s32 %s64, 1
      %s66 = scalar_select %p63, %s64, %s65
      %p69 = pneg %p63
      %p70 = scmp.eq.s32.totalorder %s14, 1
      %p71 = por %p69, %p70
      %p72 = scmp.ne.s32.totalorder %s64, %s67
      %p73 = scmp.eq.s32.totalorder %s14, 0
      %p74 = por %p72, %p73
      %p75 = scmp.ne.s32.totalorder %s64, %s67
      %p76 = scmp.eq.s32.totalorder %s19, 1
      %p77 = por %p75, %p76
      %p78 = scmp.ne.s32.totalorder %s67, %s68
      %p79 = scmp.eq.s32.totalorder %s19, 0
      %p80 = por %p78, %p79
      %p81 = scmp.ne.s32.totalorder %s67, %s68
      %p82 = scmp.eq.s32.totalorder %s20, 1
      %p83 = por %p81, %p82
      %p85 = scmp.ne.s32.totalorder %s68, %s84
      %p86 = scmp.eq.s32.totalorder %s20, 0
      %p87 = por %p85, %p86
      %s88 = ssub.s32 %s21, %s33
      %s89 = ssub.s32 %s22, %s29
      %s90 = sor.u32 %s88, %s89
      %p91 = scmp.eq.s32.totalorder %s90, 0
      %s93 = sadd.s32 %s92, 1
      %s94 = scalar_select %p91, %s92, %s93
      %p97 = pneg %p91
      %p98 = scmp.eq.s32.totalorder %s14, 1
      %p99 = por %p97, %p98
      %p100 = scmp.ne.s32.totalorder %s92, %s95
      %p101 = scmp.eq.s32.totalorder %s14, 0
      %p102 = por %p100, %p101
      %p103 = scmp.ne.s32.totalorder %s92, %s95
      %p104 = scmp.eq.s32.totalorder %s19, 1
      %p105 = por %p103, %p104
      %p106 = scmp.ne.s32.totalorder %s95, %s96
      %p107 = scmp.eq.s32.totalorder %s19, 0
      %p108 = por %p106, %p107
      %p109 = scmp.ne.s32.totalorder %s95, %s96
      %p110 = scmp.eq.s32.totalorder %s20, 1
      %p111 = por %p109, %p110
      %p113 = scmp.ne.s32.totalorder %s96, %s112
      %p114 = scmp.eq.s32.totalorder %s20, 0
      %p115 = por %p113, %p114
      %p116 = scmp.le.s32.totalorder 1, %s14
      %p117 = scmp.lt.s32.totalorder %s14, 3
      %p118 = pnand %p116, %p117
      %p119 = pneg %p118
      // Predicated region
      $region9: #{tpu_custom_call.1} parent=5 // pred_check
        _
      $region10: #{tpu_custom_call.1} parent=5 // pred_check_branch
        %121 = sbr.rel (%p118) target = $region12
      $region11: #{tpu_custom_call.1} parent=5 // pred_region
        %s122 = ssub.s32 %s14, 1
        // Predicated region
        $region13: #{tpu_custom_call.1} parent=11 // pred_check
          %p123 = pneg %p80
        $region14: #{tpu_custom_call.1} parent=11 // pred_check_branch
          %125 = sbr.rel (%p123) target = $region16
        $region15: #{tpu_custom_call.1} parent=11 // pred_region
          %p126 = scmp.lt.s32.totalorder %s23, 0
          %s127 = scalar_select %p126, %s23, 0
          %s128 = smul.addr %s127, 8
          %s129 = scalar_lea.vmem %s1, %s128
        $region16: #{tpu_custom_call.1} parent=11 // pred_fallthru
          _
      $region12: #{tpu_custom_call.1} parent=5 // pred_fallthru
        _
      %p130 = scmp.lt.s32.totalorder %s14, 2
      // Predicated region
      $region17: #{tpu_custom_call.1} parent=5 // pred_check
        %p131 = pneg %p130
      $region18: #{tpu_custom_call.1} parent=5 // pred_check_branch
        %133 = sbr.rel (%p131) target = $region20
      $region19: #{tpu_custom_call.1} parent=5 // pred_region
        // Predicated region
        $region21: #{tpu_custom_call.1} parent=19 // pred_check
          %p134 = pneg %p48
        $region22: #{tpu_custom_call.1} parent=19 // pred_check_branch
          %136 = sbr.rel (%p134) target = $region24
        $region23: #{tpu_custom_call.1} parent=19 // pred_region
          %s137 = sand.u32 %s38, 1
          %s138 = scalar_lea.sflag [#allocation3], %s137
          %s139 = sand.u32 %s38, 1
          %s140 = smul.addr %s139, 8
          %s141 = scalar_lea.vmem [#allocation2], %s140
          %s143 = ssub.s32 128, 128
          %144 = vsyncadd %s138, %s143
          %s145 = smul.addr %s21, 2
          %s146 = sadd.s32 %s22, %s145
          %s147 = smul.addr %s146, 128
          %s148 = scalar_lea.hbm %s0, %s147
          %s150 = sshll.u32 %s141, 4
          %s151 = int_to_ptr.vmem [resolvable:$true] %s150
          %153 = dma.hbm_to_vmem [thread:$0]  %s148, 128, %s151, %s138
        $region24: #{tpu_custom_call.1} parent=19 // pred_fallthru
          _
      $region20: #{tpu_custom_call.1} parent=5 // pred_fallthru
        _
      %p154 = scmp.le.s32.totalorder 1, %s14
      %p155 = scmp.lt.s32.totalorder %s14, 3
      %p156 = pnand %p154, %p155
      %p157 = pneg %p156
      // Predicated region
      $region25: #{tpu_custom_call.1} parent=5 // pred_check
        _
      $region26: #{tpu_custom_call.1} parent=5 // pred_check_branch
        %159 = sbr.rel (%p156) target = $region28
      $region27: #{tpu_custom_call.1} parent=5 // pred_region
        %s160 = ssub.s32 %s14, 1
        %s161 = sand.u32 %s41, 1
        %s162 = scalar_lea.sflag [#allocation3], %s161
        %s163 = sand.u32 %s41, 1
        %s164 = smul.addr %s163, 8
        %s165 = scalar_lea.vmem [#allocation2], %s164
        // Predicated region
        $region29: #{tpu_custom_call.1} parent=27 // pred_check
          %p166 = pneg %p54
        $region30: #{tpu_custom_call.1} parent=27 // pred_check_branch
          %168 = sbr.rel (%p166) target = $region32
        $region31: #{tpu_custom_call.1} parent=27 // pred_region
          %169 = dma.done %s162, 128
        $region32: #{tpu_custom_call.1} parent=27 // pred_fallthru
          _
        %s170 = sand.u32 %s41, 1
        %s171 = scalar_lea.sflag [#allocation3], %s170
        %s172 = sand.u32 %s41, 1
        %s173 = smul.addr %s172, 8
        %s174 = scalar_lea.vmem [#allocation2], %s173
        %p175 = pneg %p54
        %p176 = pneg %p51
        %p177 = scmp.lt.s32.totalorder %s23, 0
        %s178 = scalar_select %p177, %s23, 0
        %s179 = smul.addr %s178, 8
        %s180 = scalar_lea.vmem %s1, %s179
        %p181 = pneg %p80
        %p182 = pneg %p77
        %p183 = pneg %p108
        %p184 = pneg %p105
        %s185 = sand.u32 %s95, 1
        %s186 = scalar_lea.sflag [#allocation4], %s185
        %s187 = sand.u32 %s95, 1
        %s188 = smul.addr %s187, 8
        %s189 = scalar_lea.vmem [#allocation5], %s188
        %p190 = scmp.lt.s32.totalorder %s23, 0
        %s191 = scalar_select %p190, %s23, 0
        %s192 = smul.addr %s191, 8
        %s193 = scalar_lea.vmem %s1, %s192
        %v194 = vld [vmem:[%s165] sm:$0xff]
        %v195 = vld [vmem:[%s193] sm:$0xff]
        %197 = vset.pattern.permute.xlu0 0
        %198 = vperm.xlu0 %197, %v195
        %v199 = vpop.permute.xlu0 %198
        %v201 = vmul.f32 %v194, %v199
        %202 = vst [vmem:[%s189] sm:$0xff] %v201
        %s203 = sand.u32 %s95, 1
        %s204 = scalar_lea.sflag [#allocation4], %s203
        %s205 = sand.u32 %s95, 1
        %s206 = smul.addr %s205, 8
        %s207 = scalar_lea.vmem [#allocation5], %s206
        // Predicated region
        $region33: #{tpu_custom_call.1} parent=27 // pred_check
          %p208 = pneg %p105
        $region34: #{tpu_custom_call.1} parent=27 // pred_check_branch
          %210 = sbr.rel (%p208) target = $region36
        $region35: #{tpu_custom_call.1} parent=27 // pred_region
          %s212 = ssub.s32 128, 128
          %213 = vsyncadd %s204, %s212
          %s214 = smul.addr %s23, 2
          %s215 = sadd.s32 %s24, %s214
          %s216 = smul.addr %s215, 128
          %s217 = scalar_lea.hbm %s2, %s216
          %s219 = sshll.u32 %s207, 4
          %s220 = int_to_ptr.vmem [resolvable:$true] %s219
          %222 = dma.vmem_to_hbm [thread:$0]  %s220, 128, %s217, %s204
        $region36: #{tpu_custom_call.1} parent=27 // pred_fallthru
          _
      $region28: #{tpu_custom_call.1} parent=5 // pred_fallthru
        _
      %p223 = scmp.le.s32.totalorder 2, %s14
      // Predicated region
      $region37: #{tpu_custom_call.1} parent=5 // pred_check
        %p224 = pneg %p223
      $region38: #{tpu_custom_call.1} parent=5 // pred_check_branch
        %226 = sbr.rel (%p224) target = $region40
      $region39: #{tpu_custom_call.1} parent=5 // pred_region
        %s227 = ssub.s32 %s14, 2
        // Predicated region
        $region41: #{tpu_custom_call.1} parent=39 // pred_check
          %p228 = pneg %p111
        $region42: #{tpu_custom_call.1} parent=39 // pred_check_branch
          %230 = sbr.rel (%p228) target = $region44
        $region43: #{tpu_custom_call.1} parent=39 // pred_region
          %s231 = sand.u32 %s96, 1
          %s232 = scalar_lea.sflag [#allocation4], %s231
          %s233 = sand.u32 %s96, 1
          %s234 = smul.addr %s233, 8
          %s235 = scalar_lea.vmem [#allocation5], %s234
          %236 = dma.done %s232, 128
        $region44: #{tpu_custom_call.1} parent=39 // pred_fallthru
          _
      $region40: #{tpu_custom_call.1} parent=5 // pred_fallthru
        _
    $region6: #{tpu_custom_call.1} parent=1 // loop_footer
      %s18 = sadd.s32 1, %s14
    $region7: #{tpu_custom_call.1} parent=1 // loop_footer_branch
      %13 = sbr.rel target = $region3
    $region8: #{tpu_custom_call.1} parent=1 // loop_exit
      _
    %237 = vsyncpa [#allocation3], 1
    %s238 = scalar_lea.sflag [#allocation3], 1
    %239 = vsyncpa %s238, 1
    %240 = vsyncpa [#allocation4], 1
    %s241 = scalar_lea.sflag [#allocation4], 1
    %242 = vsyncpa %s241, 1

</llo_original>
